<compile_context>
chip_gen: v6e
topology: v6e:2x2x1
jax: 0.10.0
libtpu: 0.0.40
codegen_flags: <defaults>
</compile_context>

<pallas_src>
import jax
import jax.numpy as jnp
import numpy as np
from jax import lax
from jax.experimental import pallas as pl
from jax.experimental.pallas import tpu as pltpu

BN_EPS = 1e-5
VMEM_LIMIT_BYTES = 48 << 20     # safe on v5e/v6e (128 MiB phys) and v7x (64 MiB phys)
VMEM_BUDGET_BYTES = 32 << 20    # budget used when sizing the per-step image block
MAX_IMAGES_PER_STEP = 8         # per-image loop is statically unrolled; keep it short


# --------------------------------------------------------------------------------------
# pass 1: per-channel BN statistics -> folded (scale, shift)
# --------------------------------------------------------------------------------------
def _make_stats_kernel(inv_count):
    def bn_stats_kernel(x_ref, gamma_ref, beta_ref, scale_ref, shift_ref,
                        sum_sc, sq_sc):
        step = pl.program_id(0)

        @pl.when(step == 0)
        def _():
            sum_sc[...] = jnp.zeros_like(sum_sc)
            sq_sc[...] = jnp.zeros_like(sq_sc)

        x = x_ref[...].astype(jnp.float32)              # (B, Cin, HW)
        xs = jnp.sum(x, axis=0)                         # (Cin, HW)
        xq = jnp.sum(x * x, axis=0)                     # (Cin, HW)
        sum_sc[...] += jnp.sum(xs, axis=1, keepdims=True)   # (Cin, 1)
        sq_sc[...] += jnp.sum(xq, axis=1, keepdims=True)

        @pl.when(step == pl.num_programs(0) - 1)
        def _():
            mean = sum_sc[...] * inv_count
            var = sq_sc[...] * inv_count - mean * mean  # biased (training-mode) variance
            inv_std = lax.rsqrt(var + BN_EPS)
            scale = gamma_ref[...] * inv_std
            scale_ref[...] = scale
            shift_ref[...] = beta_ref[...] - mean * scale

    return bn_stats_kernel


# --------------------------------------------------------------------------------------
# pass 2: normalize + ReLU + 3x3 conv (9 rolled tap-matmuls) + channel concat
# --------------------------------------------------------------------------------------
def _make_main_kernel(b_imgs, cin, cout, h, w):
    hw = h * w

    def single_layer_kernel(x_ref, scale_ref, shift_ref, w9_ref, o_ref):
        scale = scale_ref[...]                          # (Cin, 1) f32
        shift = shift_ref[...]                          # (Cin, 1) f32

        # per-position validity masks for the 3x3 taps, built once per grid step
        pos = lax.broadcasted_iota(jnp.int32, (1, hw), 1)
        col = pos % w
        row = pos // w
        col_ok = {-1: col >= 1, 1: col < (w - 1)}
        row_ok = {-1: row >= 1, 1: row < (h - 1)}

        taps = []
        for kh in range(3):
            for kw in range(3):
                dh, dw = kh - 1, kw - 1
                m = None
                if dh != 0:
                    m = row_ok[dh]
                if dw != 0:
                    m = col_ok[dw] if m is None else jnp.logical_and(m, col_ok[dw])
                taps.append((kh * 3 + kw, dh * w + dw, m))

        for b in range(b_imgs):
            xb = x_ref[b]                               # (Cin, HW), io dtype
            # folded BN affine + ReLU in f32, then drop to the IO/MXU dtype
            yb = jnp.maximum(xb.astype(jnp.float32) * scale + shift, 0.0)
            yb = yb.astype(xb.dtype)

            acc = jnp.zeros((cout, hw), jnp.float32)
            for k, s, m in taps:
                # z[:, p] = y[:, p + s] (shift via XLU rotate, invalid positions masked)
                z = yb if s == 0 else pltpu.roll(yb, (-s) % hw, 1)
                if m is not None:
                    z = jnp.where(m, z, jnp.array(0, z.dtype))
                acc = acc + jnp.dot(w9_ref[k], z, preferred_element_type=jnp.float32)

            # channel concat [x | conv] written directly into the lane-dense output block
            o_ref[b, :cin, :] = xb
            o_ref[b, cin:, :] = acc.astype(o_ref.dtype)

    return single_layer_kernel


def _choose_image_block(n, per_image_bytes, budget_bytes):
    """Largest divisor of n (<= MAX_IMAGES_PER_STEP) fitting the VMEM budget,
    preferring choices that leave >= 2 grid steps (pipelining / v7x megacore)."""
    candidates = [d for d in range(1, min(n, MAX_IMAGES_PER_STEP) + 1)
                  if n % d == 0 and d * per_image_bytes <= budget_bytes]
    if not candidates:
        return 1
    pref = [d for d in candidates if n // d >= 2]
    return max(pref) if pref else max(candidates)


def single_layer_forward(x_nchw, conv_w, gamma, beta):
    """x: (N, Cin, H, W); conv_w: (Cout, Cin, 3, 3); gamma/beta: (Cin,)."""
    n, cin, h, w = x_nchw.shape
    cout = conv_w.shape[0]
    hw = h * w
    ctot = cin + cout
    io_dtype = x_nchw.dtype
    iob = np.dtype(io_dtype).itemsize

    # free, contiguous reshape: NCHW kept, spatial dims merged -> lane axis = H*W
    x3 = x_nchw.reshape(n, cin, hw)
    g2 = gamma.reshape(cin, 1).astype(jnp.float32)
    b2 = beta.reshape(cin, 1).astype(jnp.float32)
    # (Cout, Cin, 3, 3) -> (9, Cout, Cin); w9[kh*3+kw] = conv_w[:, :, kh, kw]
    w9 = jnp.transpose(conv_w, (2, 3, 0, 1)).reshape(9, cout, cin).astype(io_dtype)

    # size the per-step image block from a VMEM budget
    fixed_bytes = (2 * cin + cout) * hw * 4 + 9 * cout * cin * iob   # y, z, acc, weights
    per_image_bytes = 2 * (cin + ctot) * hw * iob                    # dbl-buffered in/out
    b_imgs = _choose_image_block(
        n, per_image_bytes, max(VMEM_BUDGET_BYTES - fixed_bytes, per_image_bytes))
    grid = (n // b_imgs,)

    # ---- pass 1: BN statistics -> folded per-channel (scale, shift) ----------------
    scale, shift = pl.pallas_call(
        _make_stats_kernel(1.0 / float(n * hw)),
        out_shape=(jax.ShapeDtypeStruct((cin, 1), jnp.float32),
                   jax.ShapeDtypeStruct((cin, 1), jnp.float32)),
        grid=grid,
        in_specs=[
            pl.BlockSpec((b_imgs, cin, hw), lambda i: (i, 0, 0)),
            pl.BlockSpec((cin, 1), lambda i: (0, 0)),
            pl.BlockSpec((cin, 1), lambda i: (0, 0)),
        ],
        out_specs=(pl.BlockSpec((cin, 1), lambda i: (0, 0)),
                   pl.BlockSpec((cin, 1), lambda i: (0, 0))),
        scratch_shapes=[pltpu.VMEM((cin, 1), jnp.float32),
                        pltpu.VMEM((cin, 1), jnp.float32)],
        compiler_params=pltpu.CompilerParams(
            dimension_semantics=("arbitrary",),
            vmem_limit_bytes=VMEM_LIMIT_BYTES),
    )(x3, g2, b2)

    # ---- pass 2: normalize + ReLU + 3x3 conv + channel concat ----------------------
    out3 = pl.pallas_call(
        _make_main_kernel(b_imgs, cin, cout, h, w),
        out_shape=jax.ShapeDtypeStruct((n, ctot, hw), io_dtype),
        grid=grid,
        in_specs=[
            pl.BlockSpec((b_imgs, cin, hw), lambda i: (i, 0, 0)),
            pl.BlockSpec((cin, 1), lambda i: (0, 0)),
            pl.BlockSpec((cin, 1), lambda i: (0, 0)),
            pl.BlockSpec((9, cout, cin), lambda i: (0, 0, 0)),
        ],
        out_specs=pl.BlockSpec((b_imgs, ctot, hw), lambda i: (i, 0, 0)),
        compiler_params=pltpu.CompilerParams(
            dimension_semantics=("parallel",),
            vmem_limit_bytes=VMEM_LIMIT_BYTES),
    )(x3, scale, shift, w9)

    return out3.reshape(n, ctot, h, w)


def single_layer_reference(x, conv_w, gamma, beta):
    """Pure-JAX reference matching the PyTorch module (training-mode BN)."""
    mean = jnp.mean(x, axis=(0, 2, 3), keepdims=True)
    var = jnp.mean((x - mean) ** 2, axis=(0, 2, 3), keepdims=True)
    y = (x - mean) * lax.rsqrt(var + BN_EPS)
    y = y * gamma.reshape(1, -1, 1, 1) + beta.reshape(1, -1, 1, 1)
    y = jnp.maximum(y, 0.0)
    out = lax.conv_general_dilated(
        y, conv_w, window_strides=(1, 1), padding="SAME",
        dimension_numbers=("NCHW", "OIHW", "NCHW"))
    return jnp.concatenate([x, out], axis=1)


if __name__ == "__main__":
    N, Cin, H, W = 2, 8, 16, 16
    growth = 4                                  # growthRate

    key = jax.random.PRNGKey(0)
    kx, kw, kg, kb = jax.random.split(key, 4)

    x = jax.random.normal(kx, (N, Cin, H, W), dtype=jnp.float32)
    conv_w = jax.random.normal(kw, (growth, Cin, 3, 3), dtype=jnp.float32) * (
        1.0 / np.sqrt(Cin * 9))
    gamma = 1.0 + 0.1 * jax.random.normal(kg, (Cin,), dtype=jnp.float32)
    beta = 0.1 * jax.random.normal(kb, (Cin,), dtype=jnp.float32)

    out = single_layer_forward(x, conv_w, gamma, beta)
    out = jax.block_until_ready(out)

    ref = single_layer_reference(x, conv_w, gamma, beta)
    np.testing.assert_allclose(np.asarray(out), np.asarray(ref),
                               rtol=1e-4, atol=1e-4)

    print("KERNEL_OK")
</pallas_src>

<mosaic_0001>
module attributes {stable_mosaic.version = 11 : i64} {
  func.func @bn_stats_kernel(%arg0: i32, %arg1: memref<1x8x256xf32, #tpu.memory_space<vmem>>, %arg2: memref<8x1xf32, #tpu.memory_space<vmem>>, %arg3: memref<8x1xf32, #tpu.memory_space<vmem>>, %arg4: memref<8x1xf32, #tpu.memory_space<vmem>>, %arg5: memref<8x1xf32, #tpu.memory_space<vmem>>, %arg6: memref<8x1xf32, #tpu.memory_space<vmem>>, %arg7: memref<8x1xf32, #tpu.memory_space<vmem>>) attributes {dimension_semantics = [#tpu.dimension_semantics<arbitrary>], iteration_bounds = array<i64: 2>, scalar_prefetch = 0 : i64, scratch_operands = 2 : i64, tpu.core_type = #tpu.core_type<tc>, window_params = [{transform_indices = @transform_0, window_bounds = array<i64: 1, 8, 256>}, {pipeline_mode = #tpu.pipeline_mode<synchronous>, transform_indices = @transform_1, window_bounds = array<i64: 8, 1>}, {pipeline_mode = #tpu.pipeline_mode<synchronous>, transform_indices = @transform_2, window_bounds = array<i64: 8, 1>}, {pipeline_mode = #tpu.pipeline_mode<synchronous>, transform_indices = @transform_3, window_bounds = array<i64: 8, 1>}, {pipeline_mode = #tpu.pipeline_mode<synchronous>, transform_indices = @transform_4, window_bounds = array<i64: 8, 1>}]} {
    %c0_i32 = arith.constant 0 : i32
    %0 = arith.cmpi eq, %arg0, %c0_i32 : i32
    %1 = arith.extui %0 : i1 to i32
    %c0_i32_0 = arith.constant 0 : i32
    %2 = arith.cmpi ne, %1, %c0_i32_0 : i32
    scf.if %2 {
      %cst_15 = arith.constant 0.000000e+00 : f32
      %20 = vector.broadcast %cst_15 : f32 to vector<8x1xf32>
      %c0_16 = arith.constant 0 : index
      %c0_17 = arith.constant 0 : index
      %21 = vector.load %arg6[%c0_16, %c0_17] : memref<8x1xf32, #tpu.memory_space<vmem>>, vector<8x1xf32>
      tpu.vector_store %arg6[%c0_16, %c0_17], %20 {strides = array<i32>} : memref<8x1xf32, #tpu.memory_space<vmem>>, vector<8x1xf32>,
      %cst_18 = arith.constant 0.000000e+00 : f32
      %22 = vector.broadcast %cst_18 : f32 to vector<8x1xf32>
      %c0_19 = arith.constant 0 : index
      %c0_20 = arith.constant 0 : index
      %23 = vector.load %arg7[%c0_19, %c0_20] : memref<8x1xf32, #tpu.memory_space<vmem>>, vector<8x1xf32>
      tpu.vector_store %arg7[%c0_19, %c0_20], %22 {strides = array<i32>} : memref<8x1xf32, #tpu.memory_space<vmem>>, vector<8x1xf32>,
    } else {
    }
    %c0 = arith.constant 0 : index
    %c0_1 = arith.constant 0 : index
    %c0_2 = arith.constant 0 : index
    %3 = vector.load %arg1[%c0, %c0_1, %c0_2] : memref<1x8x256xf32, #tpu.memory_space<vmem>>, vector<1x8x256xf32>
    %cst = arith.constant dense<0.000000e+00> : vector<8x256xf32>
    %4 = vector.multi_reduction <add>, %3, %cst [0] : vector<1x8x256xf32> to vector<8x256xf32>
    %5 = arith.mulf %3, %3 : vector<1x8x256xf32>
    %cst_3 = arith.constant dense<0.000000e+00> : vector<8x256xf32>
    %6 = vector.multi_reduction <add>, %5, %cst_3 [0] : vector<1x8x256xf32> to vector<8x256xf32>
    %c0_4 = arith.constant 0 : index
    %c0_5 = arith.constant 0 : index
    %7 = vector.load %arg6[%c0_4, %c0_5] : memref<8x1xf32, #tpu.memory_space<vmem>>, vector<8x1xf32>
    %cst_6 = arith.constant dense<0.000000e+00> : vector<8xf32>
    %8 = vector.multi_reduction <add>, %4, %cst_6 [1] : vector<8x256xf32> to vector<8xf32>
    %9 = vector.shape_cast %8 : vector<8xf32> to vector<8x1xf32>
    %10 = arith.addf %7, %9 : vector<8x1xf32>
    %c0_7 = arith.constant 0 : index
    %c0_8 = arith.constant 0 : index
    %11 = vector.load %arg6[%c0_7, %c0_8] : memref<8x1xf32, #tpu.memory_space<vmem>>, vector<8x1xf32>
    tpu.vector_store %arg6[%c0_7, %c0_8], %10 {strides = array<i32>} : memref<8x1xf32, #tpu.memory_space<vmem>>, vector<8x1xf32>,
    %c0_9 = arith.constant 0 : index
    %c0_10 = arith.constant 0 : index
    %12 = vector.load %arg7[%c0_9, %c0_10] : memref<8x1xf32, #tpu.memory_space<vmem>>, vector<8x1xf32>
    %cst_11 = arith.constant dense<0.000000e+00> : vector<8xf32>
    %13 = vector.multi_reduction <add>, %6, %cst_11 [1] : vector<8x256xf32> to vector<8xf32>
    %14 = vector.shape_cast %13 : vector<8xf32> to vector<8x1xf32>
    %15 = arith.addf %12, %14 : vector<8x1xf32>
    %c0_12 = arith.constant 0 : index
    %c0_13 = arith.constant 0 : index
    %16 = vector.load %arg7[%c0_12, %c0_13] : memref<8x1xf32, #tpu.memory_space<vmem>>, vector<8x1xf32>
    tpu.vector_store %arg7[%c0_12, %c0_13], %15 {strides = array<i32>} : memref<8x1xf32, #tpu.memory_space<vmem>>, vector<8x1xf32>,
    %c1_i32 = arith.constant 1 : i32
    %17 = arith.cmpi eq, %arg0, %c1_i32 : i32
    %18 = arith.extui %17 : i1 to i32
    %c0_i32_14 = arith.constant 0 : i32
    %19 = arith.cmpi ne, %18, %c0_i32_14 : i32
    scf.if %19 {
      %c0_15 = arith.constant 0 : index
      %c0_16 = arith.constant 0 : index
      %20 = vector.load %arg6[%c0_15, %c0_16] : memref<8x1xf32, #tpu.memory_space<vmem>>, vector<8x1xf32>
      %cst_17 = arith.constant 0.001953125 : f32
      %21 = vector.broadcast %cst_17 : f32 to vector<8x1xf32>
      %22 = arith.mulf %20, %21 : vector<8x1xf32>
      %c0_18 = arith.constant 0 : index
      %c0_19 = arith.constant 0 : index
      %23 = vector.load %arg7[%c0_18, %c0_19] : memref<8x1xf32, #tpu.memory_space<vmem>>, vector<8x1xf32>
      %cst_20 = arith.constant 0.001953125 : f32
      %24 = vector.broadcast %cst_20 : f32 to vector<8x1xf32>
      %25 = arith.mulf %23, %24 : vector<8x1xf32>
      %26 = arith.mulf %22, %22 : vector<8x1xf32>
      %27 = arith.subf %25, %26 : vector<8x1xf32>
      %cst_21 = arith.constant 9.99999974E-6 : f32
      %28 = vector.broadcast %cst_21 : f32 to vector<8x1xf32>
      %29 = arith.addf %27, %28 : vector<8x1xf32>
      %30 = math.rsqrt %29 : vector<8x1xf32>
      %c0_22 = arith.constant 0 : index
      %c0_23 = arith.constant 0 : index
      %31 = vector.load %arg2[%c0_22, %c0_23] : memref<8x1xf32, #tpu.memory_space<vmem>>, vector<8x1xf32>
      %32 = arith.mulf %31, %30 : vector<8x1xf32>
      %c0_24 = arith.constant 0 : index
      %c0_25 = arith.constant 0 : index
      %33 = vector.load %arg4[%c0_24, %c0_25] : memref<8x1xf32, #tpu.memory_space<vmem>>, vector<8x1xf32>
      tpu.vector_store %arg4[%c0_24, %c0_25], %32 {strides = array<i32>} : memref<8x1xf32, #tpu.memory_space<vmem>>, vector<8x1xf32>,
      %c0_26 = arith.constant 0 : index
      %c0_27 = arith.constant 0 : index
      %34 = vector.load %arg3[%c0_26, %c0_27] : memref<8x1xf32, #tpu.memory_space<vmem>>, vector<8x1xf32>
      %35 = arith.mulf %22, %32 : vector<8x1xf32>
      %36 = arith.subf %34, %35 : vector<8x1xf32>
      %c0_28 = arith.constant 0 : index
      %c0_29 = arith.constant 0 : index
      %37 = vector.load %arg5[%c0_28, %c0_29] : memref<8x1xf32, #tpu.memory_space<vmem>>, vector<8x1xf32>
      tpu.vector_store %arg5[%c0_28, %c0_29], %36 {strides = array<i32>} : memref<8x1xf32, #tpu.memory_space<vmem>>, vector<8x1xf32>,
    } else {
    }
    return
  }
  func.func @transform_0(%arg0: i32) -> (i32, i32, i32) {
    %c0_i32 = arith.constant 0 : i32
    %c0_i32_0 = arith.constant 0 : i32
    %c0_i32_1 = arith.constant 0 : i32
    return %arg0, %c0_i32, %c0_i32_0 : i32, i32, i32
  }
  func.func @transform_1(%arg0: i32) -> (i32, i32) {
    %c0_i32 = arith.constant 0 : i32
    %c0_i32_0 = arith.constant 0 : i32
    %c0_i32_1 = arith.constant 0 : i32
    return %c0_i32, %c0_i32_0 : i32, i32
  }
  func.func @transform_2(%arg0: i32) -> (i32, i32) {
    %c0_i32 = arith.constant 0 : i32
    %c0_i32_0 = arith.constant 0 : i32
    %c0_i32_1 = arith.constant 0 : i32
    return %c0_i32, %c0_i32_0 : i32, i32
  }
  func.func @transform_3(%arg0: i32) -> (i32, i32) {
    %c0_i32 = arith.constant 0 : i32
    %c0_i32_0 = arith.constant 0 : i32
    %c0_i32_1 = arith.constant 0 : i32
    return %c0_i32, %c0_i32_0 : i32, i32
  }
  func.func @transform_4(%arg0: i32) -> (i32, i32) {
    %c0_i32 = arith.constant 0 : i32
    %c0_i32_0 = arith.constant 0 : i32
    %c0_i32_1 = arith.constant 0 : i32
    return %c0_i32, %c0_i32_0 : i32, i32
  }
}

</mosaic_0001>

<llo_original>
// kernel: tpu_custom_call.1
$region0: #{tpu_custom_call.1}
  #allocation0 [shape = 'u32[]', space=smem, size = 0x4, offset = 0x4, fixed_abs, tag = 'smem constant byte address 0x4 - core index']
  #allocation1 [shape = 'u32[144,128]{1,0:T(1,128)}', space=vmem, size = 0x12000, scoped, tag = 'internal scratch']
  #allocation2 [shape = 'f32[8,1]{1,0:T(8,128)}', space=vmem, size = 0x1000, scoped, tag = 'scratch operand']
  #allocation3 [shape = 'f32[8,1]{1,0:T(8,128)}', space=vmem, size = 0x1000, scoped, tag = 'scratch operand']
  %s0 = inlined_call_operand.hbm [shape: f32[2,8,256], index: 0, kind: input, shape index: {}]
  %s1 = inlined_call_operand.vmem [shape: f32[8,1], index: 1, kind: input, shape index: {}]
  %s2 = inlined_call_operand.vmem [shape: f32[8,1], index: 2, kind: input, shape index: {}]
  %s3 = inlined_call_operand.vmem [shape: f32[8,1], index: 3, kind: output, shape index: {0}]
  %s4 = inlined_call_operand.vmem [shape: f32[8,1], index: 4, kind: output, shape index: {1}]
  %5 = xla_tuple %s3, %s4
  %s6 = sld [smem:[#allocation0]]
  $region65: #{tpu_custom_call.1} parent=0
    _
  %s8 = ssub.s32 1, %s6
  %s9 = scalar_select 0, %s8, %s6
  $region1: #{tpu_custom_call.1} parent=0
    #allocation4 [shape = 'u8[16384]{0}', space=vmem, size = 0x4000, scoped, tag = 'input window, operand 0']
    #allocation5 [shape = 's32[2]{0}', space=sflag, size = 0x8, scoped, tag = 'scoped memory for tpu_custom_call.1']
    %10 = vsyncpa [#allocation5], 0
    %s11 = scalar_lea.sflag [#allocation5], 1
    %12 = vsyncpa %s11, 0
    loop: start=0, step=1, limit=4
    $region2: #{tpu_custom_call.1} parent=1 // loop_pre_header
      _
    $region3: #{tpu_custom_call.1} parent=1 // loop_header
      %s14 = sphi 0, %s18
      %p15 = scmp.ge.s32.totalorder %s14, 4
      %s24 = sphi 0, %s26
      %s27 = sphi 0, %s24
      %s28 = sphi 0, %s27
      %s44 = sphi 0, %s28
      %s48 = sphi 0, %s48
      %s50 = sphi 0, %s48
      %s51 = sphi 0, %s50
      %s65 = sphi 0, %s51
      %s69 = sphi 0, %s69
      %s71 = sphi 0, %s69
      %s72 = sphi 0, %s71
      %s86 = sphi 0, %s72
      %s90 = sphi 0, %s90
      %s92 = sphi 0, %s90
      %s93 = sphi 0, %s92
      %s107 = sphi 0, %s93
      %s111 = sphi 0, %s111
      %s113 = sphi 0, %s111
      %s114 = sphi 0, %s113
      %s128 = sphi 0, %s114
    $region4: #{tpu_custom_call.1} parent=1 // loop_header_branch
      %17 = sbr.rel (%p15) target = $region8
    $region5: #{tpu_custom_call.1} parent=1 // loop_body
      %s19 = ssub.s32 %s14, 1
      %s20 = ssub.s32 %s14, 2
      %s21 = sadd.s32 %s14, 1
      %s22 = ssub.s32 %s14, %s21
      %p23 = scmp.eq.s32.totalorder %s22, 0
      %s25 = sadd.s32 %s24, 1
      %s26 = scalar_select %p23, %s24, %s25
      %p29 = pneg %p23
      %p30 = scmp.eq.s32.totalorder %s14, 1
      %p31 = por %p29, %p30
      %p32 = scmp.ne.s32.totalorder %s24, %s27
      %p33 = scmp.eq.s32.totalorder %s14, 0
      %p34 = por %p32, %p33
      %p35 = scmp.ne.s32.totalorder %s24, %s27
      %p36 = scmp.eq.s32.totalorder %s19, 1
      %p37 = por %p35, %p36
      %p38 = scmp.ne.s32.totalorder %s27, %s28
      %p39 = scmp.eq.s32.totalorder %s19, 0
      %p40 = por %p38, %p39
      %p41 = scmp.ne.s32.totalorder %s27, %s28
      %p42 = scmp.eq.s32.totalorder %s20, 1
      %p43 = por %p41, %p42
      %p45 = scmp.ne.s32.totalorder %s28, %s44
      %p46 = scmp.eq.s32.totalorder %s20, 0
      %p47 = por %p45, %p46
      %s49 = sadd.s32 %s48, 1
      %p52 = scmp.eq.s32.totalorder %s14, 1
      %p53 = scmp.ne.s32.totalorder %s48, %s50
      %p54 = scmp.eq.s32.totalorder %s14, 0
      %p55 = por %p53, %p54
      %p56 = scmp.ne.s32.totalorder %s48, %s50
      %p57 = scmp.eq.s32.totalorder %s19, 1
      %p58 = por %p56, %p57
      %p59 = scmp.ne.s32.totalorder %s50, %s51
      %p60 = scmp.eq.s32.totalorder %s19, 0
      %p61 = por %p59, %p60
      %p62 = scmp.ne.s32.totalorder %s50, %s51
      %p63 = scmp.eq.s32.totalorder %s20, 1
      %p64 = por %p62, %p63
      %p66 = scmp.ne.s32.totalorder %s51, %s65
      %p67 = scmp.eq.s32.totalorder %s20, 0
      %p68 = por %p66, %p67
      %s70 = sadd.s32 %s69, 1
      %p73 = scmp.eq.s32.totalorder %s14, 1
      %p74 = scmp.ne.s32.totalorder %s69, %s71
      %p75 = scmp.eq.s32.totalorder %s14, 0
      %p76 = por %p74, %p75
      %p77 = scmp.ne.s32.totalorder %s69, %s71
      %p78 = scmp.eq.s32.totalorder %s19, 1
      %p79 = por %p77, %p78
      %p80 = scmp.ne.s32.totalorder %s71, %s72
      %p81 = scmp.eq.s32.totalorder %s19, 0
      %p82 = por %p80, %p81
      %p83 = scmp.ne.s32.totalorder %s71, %s72
      %p84 = scmp.eq.s32.totalorder %s20, 1
      %p85 = por %p83, %p84
      %p87 = scmp.ne.s32.totalorder %s72, %s86
      %p88 = scmp.eq.s32.totalorder %s20, 0
      %p89 = por %p87, %p88
      %s91 = sadd.s32 %s90, 1
      %p94 = scmp.eq.s32.totalorder %s14, 1
      %p95 = scmp.ne.s32.totalorder %s90, %s92
      %p96 = scmp.eq.s32.totalorder %s14, 0
      %p97 = por %p95, %p96
      %p98 = scmp.ne.s32.totalorder %s90, %s92
      %p99 = scmp.eq.s32.totalorder %s19, 1
      %p100 = por %p98, %p99
      %p101 = scmp.ne.s32.totalorder %s92, %s93
      %p102 = scmp.eq.s32.totalorder %s19, 0
      %p103 = por %p101, %p102
      %p104 = scmp.ne.s32.totalorder %s92, %s93
      %p105 = scmp.eq.s32.totalorder %s20, 1
      %p106 = por %p104, %p105
      %p108 = scmp.ne.s32.totalorder %s93, %s107
      %p109 = scmp.eq.s32.totalorder %s20, 0
      %p110 = por %p108, %p109
      %s112 = sadd.s32 %s111, 1
      %p115 = scmp.eq.s32.totalorder %s14, 1
      %p116 = scmp.ne.s32.totalorder %s111, %s113
      %p117 = scmp.eq.s32.totalorder %s14, 0
      %p118 = por %p116, %p117
      %p119 = scmp.ne.s32.totalorder %s111, %s113
      %p120 = scmp.eq.s32.totalorder %s19, 1
      %p121 = por %p119, %p120
      %p122 = scmp.ne.s32.totalorder %s113, %s114
      %p123 = scmp.eq.s32.totalorder %s19, 0
      %p124 = por %p122, %p123
      %p125 = scmp.ne.s32.totalorder %s113, %s114
      %p126 = scmp.eq.s32.totalorder %s20, 1
      %p127 = por %p125, %p126
      %p129 = scmp.ne.s32.totalorder %s114, %s128
      %p130 = scmp.eq.s32.totalorder %s20, 0
      %p131 = por %p129, %p130
      %p132 = scmp.le.s32.totalorder 1, %s14
      %p133 = scmp.lt.s32.totalorder %s14, 3
      %p134 = pnand %p132, %p133
      %p135 = pneg %p134
      // Predicated region
      $region9: #{tpu_custom_call.1} parent=5 // pred_check
        _
      $region10: #{tpu_custom_call.1} parent=5 // pred_check_branch
        %137 = sbr.rel (%p134) target = $region12
      $region11: #{tpu_custom_call.1} parent=5 // pred_region
        %s138 = ssub.s32 %s14, 1
        // Predicated region
        $region13: #{tpu_custom_call.1} parent=11 // pred_check
          %p139 = pneg %p61
        $region14: #{tpu_custom_call.1} parent=11 // pred_check_branch
          %141 = sbr.rel (%p139) target = $region16
        $region15: #{tpu_custom_call.1} parent=11 // pred_region
          _
        $region16: #{tpu_custom_call.1} parent=11 // pred_fallthru
          _
        // Predicated region
        $region17: #{tpu_custom_call.1} parent=11 // pred_check
          %p142 = pneg %p82
        $region18: #{tpu_custom_call.1} parent=11 // pred_check_branch
          %144 = sbr.rel (%p142) target = $region20
        $region19: #{tpu_custom_call.1} parent=11 // pred_region
          _
        $region20: #{tpu_custom_call.1} parent=11 // pred_fallthru
          _
      $region12: #{tpu_custom_call.1} parent=5 // pred_fallthru
        _
      %p145 = scmp.lt.s32.totalorder %s14, 2
      // Predicated region
      $region21: #{tpu_custom_call.1} parent=5 // pred_check
        %p146 = pneg %p145
      $region22: #{tpu_custom_call.1} parent=5 // pred_check_branch
        %148 = sbr.rel (%p146) target = $region24
      $region23: #{tpu_custom_call.1} parent=5 // pred_region
        // Predicated region
        $region25: #{tpu_custom_call.1} parent=23 // pred_check
          %p149 = pneg %p34
        $region26: #{tpu_custom_call.1} parent=23 // pred_check_branch
          %151 = sbr.rel (%p149) target = $region28
        $region27: #{tpu_custom_call.1} parent=23 // pred_region
          %s152 = sand.u32 %s24, 1
          %s153 = scalar_lea.sflag [#allocation5], %s152
          %s154 = sand.u32 %s24, 1
          %s155 = smul.addr %s154, 16
          %s156 = scalar_lea.vmem [#allocation4], %s155
          %s158 = ssub.s32 256, 256
          %159 = vsyncadd %s153, %s158
          %s160 = smul.addr %s14, 2
          %s161 = smul.addr %s160, 128
          %s162 = scalar_lea.hbm %s0, %s161
          %s164 = sshll.u32 %s156, 4
          %s165 = int_to_ptr.vmem [resolvable:$true] %s164
          %167 = dma.hbm_to_vmem [thread:$0]  %s162, 256, %s165, %s153
        $region28: #{tpu_custom_call.1} parent=23 // pred_fallthru
          _
      $region24: #{tpu_custom_call.1} parent=5 // pred_fallthru
        _
      %p168 = scmp.le.s32.totalorder 1, %s14
      %p169 = scmp.lt.s32.totalorder %s14, 3
      %p170 = pnand %p168, %p169
      %p171 = pneg %p170
      // Predicated region
      $region29: #{tpu_custom_call.1} parent=5 // pred_check
        _
      $region30: #{tpu_custom_call.1} parent=5 // pred_check_branch
        %173 = sbr.rel (%p170) target = $region32
      $region31: #{tpu_custom_call.1} parent=5 // pred_region
        %s174 = ssub.s32 %s14, 1
        %s175 = sand.u32 %s27, 1
        %s176 = scalar_lea.sflag [#allocation5], %s175
        %s177 = sand.u32 %s27, 1
        %s178 = smul.addr %s177, 16
        %s179 = scalar_lea.vmem [#allocation4], %s178
        // Predicated region
        $region33: #{tpu_custom_call.1} parent=31 // pred_check
          %p180 = pneg %p40
        $region34: #{tpu_custom_call.1} parent=31 // pred_check_branch
          %182 = sbr.rel (%p180) target = $region36
        $region35: #{tpu_custom_call.1} parent=31 // pred_region
          %183 = dma.done %s176, 256
        $region36: #{tpu_custom_call.1} parent=31 // pred_fallthru
          _
        %s184 = sand.u32 %s27, 1
        %s185 = scalar_lea.sflag [#allocation5], %s184
        %s186 = sand.u32 %s27, 1
        %s187 = smul.addr %s186, 16
        %s188 = scalar_lea.vmem [#allocation4], %s187
        %p189 = pneg %p40
        %p190 = pneg %p37
        %p191 = pneg %p61
        %p192 = pneg %p58
        %p193 = pneg %p82
        %p194 = pneg %p79
        %p195 = pneg %p103
        %p196 = pneg %p100
        %p197 = pneg %p124
        %p198 = pneg %p121
        %p199 = scmp.eq.s32.totalorder %s19, 0
        // Predicated region
        $region37: #{tpu_custom_call.1} parent=31 // pred_check
          %p200 = pneg %p199
        $region38: #{tpu_custom_call.1} parent=31 // pred_check_branch
          %202 = sbr.rel (%p200) target = $region40
        $region39: #{tpu_custom_call.1} parent=31 // pred_region
          %vm203 = vcmask 7168
          %204 = vst.msk [vmem:[#allocation2] sm:$0xff] %vm203, 0.0
          %205 = vst.msk [vmem:[#allocation3] sm:$0xff] %vm203, 0.0
        $region40: #{tpu_custom_call.1} parent=31 // pred_fallthru
          _
        %v206 = vld [vmem:[%s179] sm:$0xff]
        %v207 = vld [vmem:[%s179 + $0x8] sm:$0xff]
        %v208 = vadd.f32 %v206, 0.0
        %v209 = vadd.f32 %v207, 0.0
        %v210 = vmul.f32 %v206, %v206
        %v211 = vmul.f32 %v207, %v207
        %v212 = vadd.f32 %v210, 0.0
        %v213 = vadd.f32 %v211, 0.0
        %v214 = vld [vmem:[#allocation2] sm:$0xff]
        %v215 = vadd.f32 %v208, %v209
        %216 = vadd.xlane.f32.xlu0 %v215
        %v217 = vpop.xlane.xlu0 %216
        %v218 = vadd.f32 %v214, %v217
        %vm219 = vcmask 7168
        %220 = vst.msk [vmem:[#allocation2] sm:$0xff] %vm219, %v218
        %v221 = vld [vmem:[#allocation3] sm:$0xff]
        %v222 = vadd.f32 %v212, %v213
        %223 = vadd.xlane.f32.xlu0 %v222
        %v224 = vpop.xlane.xlu0 %223
        %v225 = vadd.f32 %v221, %v224
        %226 = vst.msk [vmem:[#allocation3] sm:$0xff] %vm219, %v225
        %p227 = scmp.eq.s32.totalorder %s19, 1
        // Predicated region
        $region41: #{tpu_custom_call.1} parent=31 // pred_check
          %p228 = pneg %p227
        $region42: #{tpu_custom_call.1} parent=31 // pred_check_branch
          %230 = sbr.rel (%p228) target = $region44
        $region43: #{tpu_custom_call.1} parent=31 // pred_region
          %v231 = vld [vmem:[#allocation2] sm:$0xff]
          %v232 = vmul.f32 %v231, 0.001953125
          %v233 = vld [vmem:[#allocation3] sm:$0xff]
          %v234 = vmul.f32 %v233, 0.001953125
          %v235 = vmul.f32 %v232, %v232
          %v236 = vsub.f32 %v234, %v235
          %v237 = vadd.f32 %v236, 1e-05
          %v238 = vrsqrt.pop %v237
          %v239 = vld [vmem:[%s1] sm:$0xff]
          %v240 = vmul.f32 %v239, %v238
          %241 = vst.msk [vmem:[%s3] sm:$0xff] %vm219, %v240
          %v242 = vld [vmem:[%s2] sm:$0xff]
          %v243 = vmul.f32 %v232, %v240
          %v244 = vsub.f32 %v242, %v243
          %245 = vst.msk [vmem:[%s4] sm:$0xff] %vm219, %v244
        $region44: #{tpu_custom_call.1} parent=31 // pred_fallthru
          _
        // Predicated region
        $region45: #{tpu_custom_call.1} parent=31 // pred_check
          %p246 = pneg %p100
        $region46: #{tpu_custom_call.1} parent=31 // pred_check_branch
          %248 = sbr.rel (%p246) target = $region48
        $region47: #{tpu_custom_call.1} parent=31 // pred_region
          _
        $region48: #{tpu_custom_call.1} parent=31 // pred_fallthru
          _
        // Predicated region
        $region49: #{tpu_custom_call.1} parent=31 // pred_check
          %p249 = pneg %p121
        $region50: #{tpu_custom_call.1} parent=31 // pred_check_branch
          %251 = sbr.rel (%p249) target = $region52
        $region51: #{tpu_custom_call.1} parent=31 // pred_region
          _
        $region52: #{tpu_custom_call.1} parent=31 // pred_fallthru
          _
        // Predicated region
        $region53: #{tpu_custom_call.1} parent=31 // pred_check
          %p252 = pneg %p100
        $region54: #{tpu_custom_call.1} parent=31 // pred_check_branch
          %254 = sbr.rel (%p252) target = $region56
        $region55: #{tpu_custom_call.1} parent=31 // pred_region
          _
        $region56: #{tpu_custom_call.1} parent=31 // pred_fallthru
          _
        // Predicated region
        $region57: #{tpu_custom_call.1} parent=31 // pred_check
          %p255 = pneg %p121
        $region58: #{tpu_custom_call.1} parent=31 // pred_check_branch
          %257 = sbr.rel (%p255) target = $region60
        $region59: #{tpu_custom_call.1} parent=31 // pred_region
          _
        $region60: #{tpu_custom_call.1} parent=31 // pred_fallthru
          _
      $region32: #{tpu_custom_call.1} parent=5 // pred_fallthru
        _
      %p258 = scmp.le.s32.totalorder 2, %s14
      // Predicated region
      $region61: #{tpu_custom_call.1} parent=5 // pred_check
        %p259 = pneg %p258
      $region62: #{tpu_custom_call.1} parent=5 // pred_check_branch
        %261 = sbr.rel (%p259) target = $region64
      $region63: #{tpu_custom_call.1} parent=5 // pred_region
        %s262 = ssub.s32 %s14, 2
      $region64: #{tpu_custom_call.1} parent=5 // pred_fallthru
        _
    $region6: #{tpu_custom_call.1} parent=1 // loop_footer
      %s18 = sadd.s32 1, %s14
    $region7: #{tpu_custom_call.1} parent=1 // loop_footer_branch
      %13 = sbr.rel target = $region3
    $region8: #{tpu_custom_call.1} parent=1 // loop_exit
      _
    %263 = vsyncpa [#allocation5], 1
    %s264 = scalar_lea.sflag [#allocation5], 1
    %265 = vsyncpa %s264, 1

</llo_original>
